<compile_context>
chip_gen: v5e
topology: v5e:2x2
jax: 0.10.0
libtpu: 0.0.40
codegen_flags: <defaults>
</compile_context>

<pallas_src>
import functools

import jax
import jax.numpy as jnp
from jax.experimental import pallas as pl
from jax.experimental.pallas import tpu as pltpu


def _num_tensorcores_per_chip():
    """Best-effort detection: v7x exposes 2 TensorCores per chip."""
    try:
        kind = jax.devices()[0].device_kind.lower()
    except Exception:
        return 1
    if "v7" in kind or "7x" in kind:
        return 2
    return 1


def conv_bn_relu_kernel(x_ref, w_ref, o_ref, *, H, W, ipb):
    # x_ref: (ipb, Cin, H*W)      ipb images of this grid block (lane-major)
    # w_ref: (Cout, 9*Cin + 1)    BN-scale-folded 3x3 weights + bias column
    # o_ref: (ipb, Cout, H*W)     lane-dense output
    Cin = x_ref.shape[1]
    HW = H * W
    L = ipb * HW

    # Fold this block's images into the lane axis: (Cin, ipb*H*W).
    if ipb == 1:
        x_wide = x_ref[0]
    else:
        x_wide = jnp.concatenate([x_ref[i] for i in range(ipb)], axis=-1)

    # Flat lane index; per-image position q and column (computed once).
    pos = jax.lax.broadcasted_iota(jnp.int32, (1, L), 1)
    q = (pos & (HW - 1)) if (HW & (HW - 1)) == 0 else (pos % HW)
    col = (pos & (W - 1)) if (W & (W - 1)) == 0 else (pos % W)

    # Hoisted boundary predicates, reused across taps.
    row_ok = {-1: q >= W, 0: None, 1: q < (H - 1) * W}
    col_ok = {-1: col != 0, 0: None, 1: col != (W - 1)}

    # Build the 9 shifted taps: lane roll (XLU) + boundary mask (VPU) implement
    # the 'same' zero padding in-kernel.  Masks are per-image, so rolling over
    # the folded lane axis cannot leak values across adjacent images (any
    # cross-image source position is exactly a masked boundary position).
    pieces = []
    for ky in range(3):
        for kx in range(3):
            dy, dx = ky - 1, kx - 1
            s = dy * W + dx                      # source offset in flat index
            if s == 0:
                shifted = x_wide
            else:
                # shifted[c, p] = x_wide[c, (p + s) mod L]; mask handles OOB.
                shifted = pltpu.roll(x_wide, shift=(-s) % L, axis=1)
            mask = None
            for m in (row_ok[dy], col_ok[dx]):
                if m is not None:
                    mask = m if mask is None else jnp.logical_and(mask, m)
            if mask is not None:
                shifted = jnp.where(mask, shifted, 0.0)
            pieces.append(shifted)
    # Ones row: contracts against the folded-bias weight column.
    pieces.append(jnp.ones((1, L), jnp.float32))
    patches = jnp.concatenate(pieces, axis=0)            # (9*Cin+1, L), regs

    # Single fat-K contraction on the MXU; BN scale/bias already folded.
    acc = jnp.dot(w_ref[...], patches,
                  preferred_element_type=jnp.float32)    # (Cout, L)

    # Epilogue is just ReLU; lane-dense (width = H*W, multiple of 128) stores.
    y = jnp.maximum(acc, 0.0)
    for i in range(ipb):
        o_ref[i] = y[:, i * HW:(i + 1) * HW].astype(o_ref.dtype)


def conv1_forward(x_nchw, w_oihw, conv_bias, bn_gamma, bn_beta,
                  bn_mean, bn_var, eps=1e-5):
    """Forward of Conv1 (Conv2d 3x3 'same' + BatchNorm2d(eval) + ReLU).

    x_nchw: (N, Cin, H, W) -> returns (N, Cout, H, W), matching PyTorch.
    """
    N, Cin, H, W = x_nchw.shape
    Cout = w_oihw.shape[0]
    HW = H * W

    # --- glue: free reshapes + tiny parameter folding (no pad/transpose of x)
    x_flat = x_nchw.reshape(N, Cin, HW).astype(jnp.float32)

    # (Cout, Cin, 3, 3) -> (Cout, ky, kx, Cin) -> (Cout, 9*Cin); col = t*Cin+c
    w2d = jnp.transpose(w_oihw, (0, 2, 3, 1)).reshape(Cout, 9 * Cin)
    w2d = w2d.astype(jnp.float32)

    inv_std = 1.0 / jnp.sqrt(bn_var.astype(jnp.float32) + eps)
    scale = bn_gamma.astype(jnp.float32) * inv_std                  # (Cout,)
    bias = (bn_beta.astype(jnp.float32)
            + (conv_bias.astype(jnp.float32)
               - bn_mean.astype(jnp.float32)) * scale)              # (Cout,)
    w_fold = w2d * scale[:, None]              # fold BN scale into weights
    w_aug = jnp.concatenate([w_fold, bias[:, None]], axis=1)        # (Cout, 37)

    # Generation-aware batch handling: 1 block on 1-TC chips (v5e/v6e),
    # num_tensorcores blocks on v7x so both cores stay busy.
    cores = _num_tensorcores_per_chip()
    n_blocks = cores if (cores > 1 and N % cores == 0 and N >= cores) else 1
    ipb = N // n_blocks                        # images folded per grid step

    kernel = functools.partial(conv_bn_relu_kernel, H=H, W=W, ipb=ipb)

    # --- hot path: Pallas kernel --------------------------------------------
    out_flat = pl.pallas_call(
        kernel,
        out_shape=jax.ShapeDtypeStruct((N, Cout, HW), jnp.float32),
        grid=(n_blocks,),
        in_specs=[
            pl.BlockSpec((ipb, Cin, HW), lambda n: (n, 0, 0)),
            pl.BlockSpec((Cout, 9 * Cin + 1), lambda n: (0, 0)),
        ],
        out_specs=pl.BlockSpec((ipb, Cout, HW), lambda n: (n, 0, 0)),
        compiler_params=pltpu.CompilerParams(
            dimension_semantics=("parallel",)),
    )(x_flat, w_aug)

    return out_flat.reshape(N, Cout, H, W)     # contiguous split: free


def _reference(x_nchw, w_oihw, conv_bias, bn_gamma, bn_beta, bn_mean, bn_var,
               eps=1e-5):
    """Pure-JAX reference (lax conv, NCHW) for correctness check."""
    y = jax.lax.conv_general_dilated(
        x_nchw.astype(jnp.float32), w_oihw.astype(jnp.float32),
        window_strides=(1, 1), padding="SAME",
        dimension_numbers=("NCHW", "OIHW", "NCHW"))
    def bc(v):
        return v.reshape(1, -1, 1, 1)
    y = y + bc(conv_bias)
    y = (y - bc(bn_mean)) / jnp.sqrt(bc(bn_var) + eps) * bc(bn_gamma) + bc(bn_beta)
    return jnp.maximum(y, 0.0)


if __name__ == "__main__":
    # Small shapes consistent with the module: N=2, in_chs=4, out_chs=8, 16x16.
    N, IN_CHS, OUT_CHS, H, W = 2, 4, 8, 16, 16

    key = jax.random.PRNGKey(0)
    kx, kw, kb, kg, kbb, km, kv = jax.random.split(key, 7)

    x = jax.random.normal(kx, (N, IN_CHS, H, W), dtype=jnp.float32)

    # Deterministic parameter init (synthetic; no checkpoint load).  BN params
    # are non-trivial so the scale/bias folding path is actually exercised.
    w = 0.1 * jax.random.normal(kw, (OUT_CHS, IN_CHS, 3, 3), dtype=jnp.float32)
    conv_bias = 0.05 * jax.random.normal(kb, (OUT_CHS,), dtype=jnp.float32)
    bn_gamma = 1.0 + 0.1 * jax.random.normal(kg, (OUT_CHS,), dtype=jnp.float32)
    bn_beta = 0.1 * jax.random.normal(kbb, (OUT_CHS,), dtype=jnp.float32)
    bn_mean = 0.1 * jax.random.normal(km, (OUT_CHS,), dtype=jnp.float32)
    bn_var = 1.0 + 0.5 * jax.random.uniform(kv, (OUT_CHS,), dtype=jnp.float32)

    out = conv1_forward(x, w, conv_bias, bn_gamma, bn_beta, bn_mean, bn_var)
    out = jax.block_until_ready(out)

    ref = _reference(x, w, conv_bias, bn_gamma, bn_beta, bn_mean, bn_var)
    assert out.shape == (N, OUT_CHS, H, W), out.shape
    assert jnp.allclose(out, ref, atol=1e-4, rtol=1e-4), \
        float(jnp.max(jnp.abs(out - ref)))

    print("KERNEL_OK")
</pallas_src>

<mosaic_0001>
module attributes {stable_mosaic.version = 11 : i64} {
  func.func @conv_bn_relu_kernel(%arg0: i32, %arg1: memref<2x4x256xf32, #tpu.memory_space<vmem>>, %arg2: memref<8x37xf32, #tpu.memory_space<vmem>>, %arg3: memref<2x8x256xf32, #tpu.memory_space<vmem>>) attributes {dimension_semantics = [#tpu.dimension_semantics<parallel>], iteration_bounds = array<i64: 1>, scalar_prefetch = 0 : i64, scratch_operands = 0 : i64, tpu.core_type = #tpu.core_type<tc>, window_params = [{transform_indices = @transform_0, window_bounds = array<i64: 2, 4, 256>}, {pipeline_mode = #tpu.pipeline_mode<synchronous>, transform_indices = @transform_1, window_bounds = array<i64: 8, 37>}, {transform_indices = @transform_2, window_bounds = array<i64: 2, 8, 256>}]} {
    %c0 = arith.constant 0 : index
    %c0_0 = arith.constant 0 : index
    %c0_1 = arith.constant 0 : index
    %0 = vector.load %arg1[%c0, %c0_0, %c0_1] : memref<2x4x256xf32, #tpu.memory_space<vmem>>, vector<1x4x256xf32>
    %1 = vector.shape_cast %0 : vector<1x4x256xf32> to vector<4x256xf32>
    %c1 = arith.constant 1 : index
    %c0_2 = arith.constant 0 : index
    %c0_3 = arith.constant 0 : index
    %2 = vector.load %arg1[%c1, %c0_2, %c0_3] : memref<2x4x256xf32, #tpu.memory_space<vmem>>, vector<1x4x256xf32>
    %3 = vector.shape_cast %2 : vector<1x4x256xf32> to vector<4x256xf32>
    %4 = tpu.concatenate %1, %3 in 1 : vector<4x256xf32>, vector<4x256xf32> -> vector<4x512xf32>
    %5 = tpu.iota {dimensions = array<i32: 1>} : vector<1x512xi32>
    %c255_i32 = arith.constant 255 : i32
    %6 = vector.broadcast %c255_i32 : i32 to vector<1x512xi32>
    %7 = arith.andi %5, %6 : vector<1x512xi32>
    %c15_i32 = arith.constant 15 : i32
    %8 = vector.broadcast %c15_i32 : i32 to vector<1x512xi32>
    %9 = arith.andi %5, %8 : vector<1x512xi32>
    %c16_i32 = arith.constant 16 : i32
    %10 = vector.broadcast %c16_i32 : i32 to vector<1x512xi32>
    %11 = arith.cmpi sge, %7, %10 : vector<1x512xi32>
    %c240_i32 = arith.constant 240 : i32
    %12 = vector.broadcast %c240_i32 : i32 to vector<1x512xi32>
    %13 = arith.cmpi slt, %7, %12 : vector<1x512xi32>
    %c0_i32 = arith.constant 0 : i32
    %14 = vector.broadcast %c0_i32 : i32 to vector<1x512xi32>
    %15 = arith.cmpi ne, %9, %14 : vector<1x512xi32>
    %c15_i32_4 = arith.constant 15 : i32
    %16 = vector.broadcast %c15_i32_4 : i32 to vector<1x512xi32>
    %17 = arith.cmpi ne, %9, %16 : vector<1x512xi32>
    %c17_i32 = arith.constant 17 : i32
    %18 = tpu.dynamic_rotate %4 by %c17_i32 dim 1 : vector<4x512xf32>, i32 -> vector<4x512xf32>
    %19 = arith.andi %11, %15 : vector<1x512xi1>
    %cst = arith.constant 0.000000e+00 : f32
    %20 = vector.shape_cast %19 : vector<1x512xi1> to vector<1x512xi1>
    %21 = vector.broadcast %20 : vector<1x512xi1> to vector<4x512xi1>
    %22 = vector.broadcast %cst : f32 to vector<4x512xf32>
    %23 = arith.select %21, %18, %22 : vector<4x512xi1>, vector<4x512xf32>
    %c16_i32_5 = arith.constant 16 : i32
    %24 = tpu.dynamic_rotate %4 by %c16_i32_5 dim 1 : vector<4x512xf32>, i32 -> vector<4x512xf32>
    %cst_6 = arith.constant 0.000000e+00 : f32
    %25 = vector.shape_cast %11 : vector<1x512xi1> to vector<1x512xi1>
    %26 = vector.broadcast %25 : vector<1x512xi1> to vector<4x512xi1>
    %27 = vector.broadcast %cst_6 : f32 to vector<4x512xf32>
    %28 = arith.select %26, %24, %27 : vector<4x512xi1>, vector<4x512xf32>
    %c15_i32_7 = arith.constant 15 : i32
    %29 = tpu.dynamic_rotate %4 by %c15_i32_7 dim 1 : vector<4x512xf32>, i32 -> vector<4x512xf32>
    %30 = arith.andi %11, %17 : vector<1x512xi1>
    %cst_8 = arith.constant 0.000000e+00 : f32
    %31 = vector.shape_cast %30 : vector<1x512xi1> to vector<1x512xi1>
    %32 = vector.broadcast %31 : vector<1x512xi1> to vector<4x512xi1>
    %33 = vector.broadcast %cst_8 : f32 to vector<4x512xf32>
    %34 = arith.select %32, %29, %33 : vector<4x512xi1>, vector<4x512xf32>
    %c1_i32 = arith.constant 1 : i32
    %35 = tpu.dynamic_rotate %4 by %c1_i32 dim 1 : vector<4x512xf32>, i32 -> vector<4x512xf32>
    %cst_9 = arith.constant 0.000000e+00 : f32
    %36 = vector.shape_cast %15 : vector<1x512xi1> to vector<1x512xi1>
    %37 = vector.broadcast %36 : vector<1x512xi1> to vector<4x512xi1>
    %38 = vector.broadcast %cst_9 : f32 to vector<4x512xf32>
    %39 = arith.select %37, %35, %38 : vector<4x512xi1>, vector<4x512xf32>
    %c511_i32 = arith.constant 511 : i32
    %40 = tpu.dynamic_rotate %4 by %c511_i32 dim 1 : vector<4x512xf32>, i32 -> vector<4x512xf32>
    %cst_10 = arith.constant 0.000000e+00 : f32
    %41 = vector.shape_cast %17 : vector<1x512xi1> to vector<1x512xi1>
    %42 = vector.broadcast %41 : vector<1x512xi1> to vector<4x512xi1>
    %43 = vector.broadcast %cst_10 : f32 to vector<4x512xf32>
    %44 = arith.select %42, %40, %43 : vector<4x512xi1>, vector<4x512xf32>
    %c497_i32 = arith.constant 497 : i32
    %45 = tpu.dynamic_rotate %4 by %c497_i32 dim 1 : vector<4x512xf32>, i32 -> vector<4x512xf32>
    %46 = arith.andi %13, %15 : vector<1x512xi1>
    %cst_11 = arith.constant 0.000000e+00 : f32
    %47 = vector.shape_cast %46 : vector<1x512xi1> to vector<1x512xi1>
    %48 = vector.broadcast %47 : vector<1x512xi1> to vector<4x512xi1>
    %49 = vector.broadcast %cst_11 : f32 to vector<4x512xf32>
    %50 = arith.select %48, %45, %49 : vector<4x512xi1>, vector<4x512xf32>
    %c496_i32 = arith.constant 496 : i32
    %51 = tpu.dynamic_rotate %4 by %c496_i32 dim 1 : vector<4x512xf32>, i32 -> vector<4x512xf32>
    %cst_12 = arith.constant 0.000000e+00 : f32
    %52 = vector.shape_cast %13 : vector<1x512xi1> to vector<1x512xi1>
    %53 = vector.broadcast %52 : vector<1x512xi1> to vector<4x512xi1>
    %54 = vector.broadcast %cst_12 : f32 to vector<4x512xf32>
    %55 = arith.select %53, %51, %54 : vector<4x512xi1>, vector<4x512xf32>
    %c495_i32 = arith.constant 495 : i32
    %56 = tpu.dynamic_rotate %4 by %c495_i32 dim 1 : vector<4x512xf32>, i32 -> vector<4x512xf32>
    %57 = arith.andi %13, %17 : vector<1x512xi1>
    %cst_13 = arith.constant 0.000000e+00 : f32
    %58 = vector.shape_cast %57 : vector<1x512xi1> to vector<1x512xi1>
    %59 = vector.broadcast %58 : vector<1x512xi1> to vector<4x512xi1>
    %60 = vector.broadcast %cst_13 : f32 to vector<4x512xf32>
    %61 = arith.select %59, %56, %60 : vector<4x512xi1>, vector<4x512xf32>
    %cst_14 = arith.constant 1.000000e+00 : f32
    %62 = vector.broadcast %cst_14 : f32 to vector<1x512xf32>
    %63 = tpu.concatenate %23, %28, %34, %39, %4, %44, %50, %55, %61, %62 in 0 : vector<4x512xf32>, vector<4x512xf32>, vector<4x512xf32>, vector<4x512xf32>, vector<4x512xf32>, vector<4x512xf32>, vector<4x512xf32>, vector<4x512xf32>, vector<4x512xf32>, vector<1x512xf32> -> vector<37x512xf32>
    %c0_15 = arith.constant 0 : index
    %c0_16 = arith.constant 0 : index
    %64 = vector.load %arg2[%c0_15, %c0_16] : memref<8x37xf32, #tpu.memory_space<vmem>>, vector<8x37xf32>
    %cst_17 = arith.constant dense<0.000000e+00> : vector<8x512xf32>
    %65 = tpu.matmul %64, %63, %cst_17 {dimension_numbers = #tpu.dot_dimension_numbers<[1], [0], [0], [1], [0, 0, 1, 1], [], []>} : vector<8x37xf32>, vector<37x512xf32>, vector<8x512xf32> -> vector<8x512xf32>
    %cst_18 = arith.constant 0.000000e+00 : f32
    %66 = vector.broadcast %cst_18 : f32 to vector<8x512xf32>
    %67 = arith.maximumf %65, %66 : vector<8x512xf32>
    %68 = vector.extract_strided_slice %67 {offsets = [0, 0], sizes = [8, 256], strides = [1, 1]} : vector<8x512xf32> to vector<8x256xf32>
    %c0_19 = arith.constant 0 : index
    %c0_20 = arith.constant 0 : index
    %c0_21 = arith.constant 0 : index
    %69 = vector.load %arg3[%c0_19, %c0_20, %c0_21] : memref<2x8x256xf32, #tpu.memory_space<vmem>>, vector<1x8x256xf32>
    %70 = vector.shape_cast %69 : vector<1x8x256xf32> to vector<8x256xf32>
    %71 = vector.shape_cast %68 : vector<8x256xf32> to vector<1x8x256xf32>
    tpu.vector_store %arg3[%c0_19, %c0_20, %c0_21], %71 {strides = array<i32>} : memref<2x8x256xf32, #tpu.memory_space<vmem>>, vector<1x8x256xf32>,
    %72 = vector.extract_strided_slice %67 {offsets = [0, 256], sizes = [8, 256], strides = [1, 1]} : vector<8x512xf32> to vector<8x256xf32>
    %c1_22 = arith.constant 1 : index
    %c0_23 = arith.constant 0 : index
    %c0_24 = arith.constant 0 : index
    %73 = vector.load %arg3[%c1_22, %c0_23, %c0_24] : memref<2x8x256xf32, #tpu.memory_space<vmem>>, vector<1x8x256xf32>
    %74 = vector.shape_cast %73 : vector<1x8x256xf32> to vector<8x256xf32>
    %75 = vector.shape_cast %72 : vector<8x256xf32> to vector<1x8x256xf32>
    tpu.vector_store %arg3[%c1_22, %c0_23, %c0_24], %75 {strides = array<i32>} : memref<2x8x256xf32, #tpu.memory_space<vmem>>, vector<1x8x256xf32>,
    return
  }
  func.func @transform_0(%arg0: i32) -> (i32, i32, i32) {
    %c0_i32 = arith.constant 0 : i32
    %c0_i32_0 = arith.constant 0 : i32
    %c0_i32_1 = arith.constant 0 : i32
    return %arg0, %c0_i32, %c0_i32_0 : i32, i32, i32
  }
  func.func @transform_1(%arg0: i32) -> (i32, i32) {
    %c0_i32 = arith.constant 0 : i32
    %c0_i32_0 = arith.constant 0 : i32
    %c0_i32_1 = arith.constant 0 : i32
    return %c0_i32, %c0_i32_0 : i32, i32
  }
  func.func @transform_2(%arg0: i32) -> (i32, i32, i32) {
    %c0_i32 = arith.constant 0 : i32
    %c0_i32_0 = arith.constant 0 : i32
    %c0_i32_1 = arith.constant 0 : i32
    return %arg0, %c0_i32, %c0_i32_0 : i32, i32, i32
  }
}

</mosaic_0001>

<llo_original>
// kernel: tpu_custom_call.1
$region0: #{tpu_custom_call.1}
  #allocation0 [shape = 'u32[]', space=smem, size = 0x4, offset = 0x4, fixed_abs, tag = 'smem constant byte address 0x4 - core index']
  #allocation1 [shape = 'u32[72,128]{1,0:T(1,128)}', space=vmem, size = 0x9000, scoped, tag = 'internal scratch']
  %s0 = inlined_call_operand.hbm [shape: f32[2,4,256], index: 0, kind: input, shape index: {}]
  %s1 = inlined_call_operand.hbm [shape: f32[8,37], index: 1, kind: input, shape index: {}]
  %s2 = inlined_call_operand.hbm [shape: f32[2,8,256], index: 2, kind: output, shape index: {}]
  %s3 = sld [smem:[#allocation0]]
  $region26: #{tpu_custom_call.1} parent=0
    _
  %s5 = ssub.s32 1, %s3
  %s6 = scalar_select 0, %s5, %s3
  $region1: #{tpu_custom_call.1} parent=0
    #allocation2 [shape = 'u8[8192]{0}', space=vmem, size = 0x2000, scoped, tag = 'input window, operand 0, single buffered']
    #allocation3 [shape = 's32[1]{0}', space=sflag, size = 0x4, scoped, tag = 'scoped memory for tpu_custom_call.1']
    #allocation4 [shape = 's32[1]{0}', space=sflag, size = 0x4, scoped, tag = 'scoped memory for tpu_custom_call.1']
    #allocation5 [shape = 'u8[4096]{0}', space=vmem, size = 0x1000, scoped, tag = 'input window, operand 1, single buffered']
    #allocation6 [shape = 's32[1]{0}', space=sflag, size = 0x4, scoped, tag = 'scoped memory for tpu_custom_call.1']
    #allocation7 [shape = 'u8[16384]{0}', space=vmem, size = 0x4000, scoped, tag = 'output window, operand 0, single buffered']
    %7 = vsyncpa [#allocation3], 0
    %8 = vsyncpa [#allocation6], 0
    %9 = vsyncpa [#allocation4], 0
    // Predicated region
    $region2: #{tpu_custom_call.1} parent=1 // pred_check
      _
    $region3: #{tpu_custom_call.1} parent=1 // pred_check_branch
      %11 = sbr.rel (0) target = $region5
    $region4: #{tpu_custom_call.1} parent=1 // pred_region
      %13 = vsyncadd [#allocation3], 0
      %s14 = sshll.u32 %s0, 4
      %s15 = int_to_ptr.hbm [resolvable:$true] %s14
      %s16 = sshll.u32 [#allocation2], 4
      %s17 = int_to_ptr.vmem [resolvable:$true] %s16
      %22 = dma.hbm_to_vmem [thread:$0]  %s15, 256, %s17, [#allocation3], 128, 128, 8
    $region5: #{tpu_custom_call.1} parent=1 // pred_fallthru
      _
    // Predicated region
    $region6: #{tpu_custom_call.1} parent=1 // pred_check
      _
    $region7: #{tpu_custom_call.1} parent=1 // pred_check_branch
      %24 = sbr.rel (0) target = $region9
    $region8: #{tpu_custom_call.1} parent=1 // pred_region
      %26 = vsyncadd [#allocation6], 0
      %s28 = sshll.u32 %s1, 4
      %s29 = int_to_ptr.hbm [resolvable:$true] %s28
      %s30 = sshll.u32 [#allocation5], 4
      %s31 = int_to_ptr.vmem [resolvable:$true] %s30
      %33 = dma.hbm_to_vmem [thread:$0]  %s29, 128, %s31, [#allocation6]
    $region9: #{tpu_custom_call.1} parent=1 // pred_fallthru
      _
    // Predicated region
    $region10: #{tpu_custom_call.1} parent=1 // pred_check
      _
    $region11: #{tpu_custom_call.1} parent=1 // pred_check_branch
      %35 = sbr.rel (0) target = $region13
    $region12: #{tpu_custom_call.1} parent=1 // pred_region
      %37 = dma.done [#allocation3], 256
    $region13: #{tpu_custom_call.1} parent=1 // pred_fallthru
      _
    // Predicated region
    $region14: #{tpu_custom_call.1} parent=1 // pred_check
      _
    $region15: #{tpu_custom_call.1} parent=1 // pred_check_branch
      %39 = sbr.rel (0) target = $region17
    $region16: #{tpu_custom_call.1} parent=1 // pred_region
      %41 = dma.done [#allocation6], 128
    $region17: #{tpu_custom_call.1} parent=1 // pred_fallthru
      _
    %v42 = vld [vmem:[#allocation2] sm:$0xff]
    %s43 = scalar_lea.vmem [#allocation2], 8
    %v44 = vld [vmem:[%s43] sm:$0xff]
    %46 = vst [vmem:[#allocation1] ss:$2 sm:$0xff] %v42
    %v47 = vld.sshfl [vmem:[#allocation1] sm:$0xff pattern:$0x75316420]
    %v48 = vld.sshfl [vmem:[#allocation1 + $0x8] sm:$0xff pattern:$0x75316420]
    %52 = vst [vmem:[#allocation1] ss:$2 sm:$0xff] %v44
    %v53 = vld.sshfl [vmem:[#allocation1] sm:$0xff pattern:$0x75316420]
    %v54 = vld.sshfl [vmem:[#allocation1 + $0x8] sm:$0xff pattern:$0x75316420]
    %v57 = vlaneseq
    %v58 = vand.u32 %v57, 127
    %v59 = vadd.s32 %v58, 128
    %v60 = vadd.s32 %v58, 256
    %v61 = vadd.s32 %v58, 384
    %v62 = vand.u32 %v58, 255
    %v63 = vand.u32 %v59, 255
    %v64 = vand.u32 %v60, 255
    %v65 = vand.u32 %v61, 255
    %v66 = vand.u32 %v58, 15
    %v67 = vand.u32 %v59, 15
    %v68 = vand.u32 %v60, 15
    %v69 = vand.u32 %v61, 15
    %vm70 = vcmp.ge.s32.totalorder %v62, 16
    %vm71 = vcmp.ge.s32.totalorder %v63, 16
    %vm72 = vcmp.ge.s32.totalorder %v64, 16
    %vm73 = vcmp.ge.s32.totalorder %v65, 16
    %vm74 = vcmp.lt.s32.totalorder %v62, 240
    %vm75 = vcmp.lt.s32.totalorder %v63, 240
    %vm76 = vcmp.lt.s32.totalorder %v64, 240
    %vm77 = vcmp.lt.s32.totalorder %v65, 240
    %vm78 = vcmp.ne.s32.totalorder %v66, 0
    %vm79 = vcmp.ne.s32.totalorder %v67, 0
    %vm80 = vcmp.ne.s32.totalorder %v68, 0
    %vm81 = vcmp.ne.s32.totalorder %v69, 0
    %vm82 = vcmp.ne.s32.totalorder %v66, 15
    %vm83 = vcmp.ne.s32.totalorder %v67, 15
    %vm84 = vcmp.ne.s32.totalorder %v68, 15
    %vm85 = vcmp.ne.s32.totalorder %v69, 15
    %86 = vrot.lane.b32.xlu0 %v47, 17
    %v87 = vpop.permute.xlu0 %86
    %88 = vrot.lane.b32.xlu0 %v48, 17
    %v89 = vpop.permute.xlu0 %88
    %90 = vrot.lane.b32.xlu0 %v53, 17
    %v91 = vpop.permute.xlu0 %90
    %92 = vrot.lane.b32.xlu0 %v54, 17
    %v93 = vpop.permute.xlu0 %92
    %vm94 = vcmp.lt.s32.totalorder %v58, 17
    %v95 = vsel %vm94, %v91, %v93
    %v96 = vsel %vm94, %v89, %v91
    %v97 = vsel %vm94, %v87, %v89
    %v98 = vsel %vm94, %v93, %v87
    %vm99 = vmand %vm70, %vm78
    %vm100 = vmand %vm71, %vm79
    %vm101 = vmand %vm72, %vm80
    %vm102 = vmand %vm73, %vm81
    %v103 = vsel %vm99, 1, 0
    %v104 = vsel %vm100, 1, 0
    %v105 = vsel %vm101, 1, 0
    %v106 = vsel %vm102, 1, 0
    %vm107 = vcmp.eq.s32.totalorder %v103, 1
    %vm108 = vcmp.eq.s32.totalorder %v104, 1
    %vm109 = vcmp.eq.s32.totalorder %v105, 1
    %vm110 = vcmp.eq.s32.totalorder %v106, 1
    %v111 = vsel %vm107, %v98, 0.0
    %v112 = vsel %vm108, %v97, 0.0
    %v113 = vsel %vm109, %v96, 0.0
    %v114 = vsel %vm110, %v95, 0.0
    %115 = vrot.lane.b32.xlu0 %v47, 16
    %v116 = vpop.permute.xlu0 %115
    %117 = vrot.lane.b32.xlu0 %v48, 16
    %v118 = vpop.permute.xlu0 %117
    %119 = vrot.lane.b32.xlu0 %v53, 16
    %v120 = vpop.permute.xlu0 %119
    %121 = vrot.lane.b32.xlu0 %v54, 16
    %v122 = vpop.permute.xlu0 %121
    %vm123 = vcmp.lt.s32.totalorder %v58, 16
    %v124 = vsel %vm123, %v120, %v122
    %v125 = vsel %vm123, %v118, %v120
    %v126 = vsel %vm123, %v116, %v118
    %v127 = vsel %vm123, %v122, %v116
    %v128 = vsel %vm70, 1, 0
    %v129 = vsel %vm71, 1, 0
    %v130 = vsel %vm72, 1, 0
    %v131 = vsel %vm73, 1, 0
    %vm132 = vcmp.eq.s32.totalorder %v128, 1
    %vm133 = vcmp.eq.s32.totalorder %v129, 1
    %vm134 = vcmp.eq.s32.totalorder %v130, 1
    %vm135 = vcmp.eq.s32.totalorder %v131, 1
    %v136 = vsel %vm132, %v127, 0.0
    %v137 = vsel %vm133, %v126, 0.0
    %v138 = vsel %vm134, %v125, 0.0
    %v139 = vsel %vm135, %v124, 0.0
    %140 = vrot.lane.b32.xlu0 %v47, 15
    %v141 = vpop.permute.xlu0 %140
    %142 = vrot.lane.b32.xlu0 %v48, 15
    %v143 = vpop.permute.xlu0 %142
    %144 = vrot.lane.b32.xlu0 %v53, 15
    %v145 = vpop.permute.xlu0 %144
    %146 = vrot.lane.b32.xlu0 %v54, 15
    %v147 = vpop.permute.xlu0 %146
    %vm148 = vcmp.lt.s32.totalorder %v58, 15
    %v149 = vsel %vm148, %v145, %v147
    %v150 = vsel %vm148, %v143, %v145
    %v151 = vsel %vm148, %v141, %v143
    %v152 = vsel %vm148, %v147, %v141
    %vm153 = vmand %vm70, %vm82
    %vm154 = vmand %vm71, %vm83
    %vm155 = vmand %vm72, %vm84
    %vm156 = vmand %vm73, %vm85
    %v157 = vsel %vm153, 1, 0
    %v158 = vsel %vm154, 1, 0
    %v159 = vsel %vm155, 1, 0
    %v160 = vsel %vm156, 1, 0
    %vm161 = vcmp.eq.s32.totalorder %v157, 1
    %vm162 = vcmp.eq.s32.totalorder %v158, 1
    %vm163 = vcmp.eq.s32.totalorder %v159, 1
    %vm164 = vcmp.eq.s32.totalorder %v160, 1
    %v165 = vsel %vm161, %v152, 0.0
    %v166 = vsel %vm162, %v151, 0.0
    %v167 = vsel %vm163, %v150, 0.0
    %v168 = vsel %vm164, %v149, 0.0
    %169 = vrot.lane.b32.xlu0 %v47, 1
    %v170 = vpop.permute.xlu0 %169
    %171 = vrot.lane.b32.xlu0 %v48, 1
    %v172 = vpop.permute.xlu0 %171
    %173 = vrot.lane.b32.xlu0 %v53, 1
    %v174 = vpop.permute.xlu0 %173
    %175 = vrot.lane.b32.xlu0 %v54, 1
    %v176 = vpop.permute.xlu0 %175
    %vm177 = vcmp.lt.s32.totalorder %v58, 1
    %v178 = vsel %vm177, %v174, %v176
    %v179 = vsel %vm177, %v172, %v174
    %v180 = vsel %vm177, %v170, %v172
    %v181 = vsel %vm177, %v176, %v170
    %v182 = vsel %vm78, 1, 0
    %v183 = vsel %vm79, 1, 0
    %v184 = vsel %vm80, 1, 0
    %v185 = vsel %vm81, 1, 0
    %vm186 = vcmp.eq.s32.totalorder %v182, 1
    %vm187 = vcmp.eq.s32.totalorder %v183, 1
    %vm188 = vcmp.eq.s32.totalorder %v184, 1
    %vm189 = vcmp.eq.s32.totalorder %v185, 1
    %v190 = vsel %vm186, %v181, 0.0
    %v191 = vsel %vm187, %v180, 0.0
    %v192 = vsel %vm188, %v179, 0.0
    %v193 = vsel %vm189, %v178, 0.0
    %194 = vrot.lane.b32.xlu0 %v47, 127
    %v195 = vpop.permute.xlu0 %194
    %196 = vrot.lane.b32.xlu0 %v48, 127
    %v197 = vpop.permute.xlu0 %196
    %198 = vrot.lane.b32.xlu0 %v53, 127
    %v199 = vpop.permute.xlu0 %198
    %200 = vrot.lane.b32.xlu0 %v54, 127
    %v201 = vpop.permute.xlu0 %200
    %vm202 = vcmp.lt.s32.totalorder %v58, 127
    %v203 = vsel %vm202, %v199, %v201
    %v204 = vsel %vm202, %v197, %v199
    %v205 = vsel %vm202, %v195, %v197
    %v206 = vsel %vm202, %v201, %v195
    %v207 = vsel %vm82, 1, 0
    %v208 = vsel %vm83, 1, 0
    %v209 = vsel %vm84, 1, 0
    %v210 = vsel %vm85, 1, 0
    %vm211 = vcmp.eq.s32.totalorder %v207, 1
    %vm212 = vcmp.eq.s32.totalorder %v208, 1
    %vm213 = vcmp.eq.s32.totalorder %v209, 1
    %vm214 = vcmp.eq.s32.totalorder %v210, 1
    %v215 = vsel %vm211, %v205, 0.0
    %v216 = vsel %vm212, %v204, 0.0
    %v217 = vsel %vm213, %v203, 0.0
    %v218 = vsel %vm214, %v206, 0.0
    %219 = vrot.lane.b32.xlu0 %v47, 113
    %v220 = vpop.permute.xlu0 %219
    %221 = vrot.lane.b32.xlu0 %v48, 113
    %v222 = vpop.permute.xlu0 %221
    %223 = vrot.lane.b32.xlu0 %v53, 113
    %v224 = vpop.permute.xlu0 %223
    %225 = vrot.lane.b32.xlu0 %v54, 113
    %v226 = vpop.permute.xlu0 %225
    %vm227 = vcmp.lt.s32.totalorder %v58, 113
    %v228 = vsel %vm227, %v224, %v226
    %v229 = vsel %vm227, %v222, %v224
    %v230 = vsel %vm227, %v220, %v222
    %v231 = vsel %vm227, %v226, %v220
    %vm232 = vmand %vm74, %vm78
    %vm233 = vmand %vm75, %vm79
    %vm234 = vmand %vm76, %vm80
    %vm235 = vmand %vm77, %vm81
    %v236 = vsel %vm232, 1, 0
    %v237 = vsel %vm233, 1, 0
    %v238 = vsel %vm234, 1, 0
    %v239 = vsel %vm235, 1, 0
    %vm240 = vcmp.eq.s32.totalorder %v236, 1
    %vm241 = vcmp.eq.s32.totalorder %v237, 1
    %vm242 = vcmp.eq.s32.totalorder %v238, 1
    %vm243 = vcmp.eq.s32.totalorder %v239, 1
    %v244 = vsel %vm240, %v230, 0.0
    %v245 = vsel %vm241, %v229, 0.0
    %v246 = vsel %vm242, %v228, 0.0
    %v247 = vsel %vm243, %v231, 0.0
    %248 = vrot.lane.b32.xlu0 %v47, 112
    %v249 = vpop.permute.xlu0 %248
    %250 = vrot.lane.b32.xlu0 %v48, 112
    %v251 = vpop.permute.xlu0 %250
    %252 = vrot.lane.b32.xlu0 %v53, 112
    %v253 = vpop.permute.xlu0 %252
    %254 = vrot.lane.b32.xlu0 %v54, 112
    %v255 = vpop.permute.xlu0 %254
    %vm256 = vcmp.lt.s32.totalorder %v58, 112
    %v257 = vsel %vm256, %v253, %v255
    %v258 = vsel %vm256, %v251, %v253
    %v259 = vsel %vm256, %v249, %v251
    %v260 = vsel %vm256, %v255, %v249
    %v261 = vsel %vm74, 1, 0
    %v262 = vsel %vm75, 1, 0
    %v263 = vsel %vm76, 1, 0
    %v264 = vsel %vm77, 1, 0
    %vm265 = vcmp.eq.s32.totalorder %v261, 1
    %vm266 = vcmp.eq.s32.totalorder %v262, 1
    %vm267 = vcmp.eq.s32.totalorder %v263, 1
    %vm268 = vcmp.eq.s32.totalorder %v264, 1
    %v269 = vsel %vm265, %v259, 0.0
    %v270 = vsel %vm266, %v258, 0.0
    %v271 = vsel %vm267, %v257, 0.0
    %v272 = vsel %vm268, %v260, 0.0
    %273 = vrot.lane.b32.xlu0 %v47, 111
    %v274 = vpop.permute.xlu0 %273
    %275 = vrot.lane.b32.xlu0 %v48, 111
    %v276 = vpop.permute.xlu0 %275
    %277 = vrot.lane.b32.xlu0 %v53, 111
    %v278 = vpop.permute.xlu0 %277
    %279 = vrot.lane.b32.xlu0 %v54, 111
    %v280 = vpop.permute.xlu0 %279
    %vm281 = vcmp.lt.s32.totalorder %v58, 111
    %v282 = vsel %vm281, %v278, %v280
    %v283 = vsel %vm281, %v276, %v278
    %v284 = vsel %vm281, %v274, %v276
    %v285 = vsel %vm281, %v280, %v274
    %vm286 = vmand %vm74, %vm82
    %vm287 = vmand %vm75, %vm83
    %vm288 = vmand %vm76, %vm84
    %vm289 = vmand %vm77, %vm85
    %v290 = vsel %vm286, 1, 0
    %v291 = vsel %vm287, 1, 0
    %v292 = vsel %vm288, 1, 0
    %v293 = vsel %vm289, 1, 0
    %vm294 = vcmp.eq.s32.totalorder %v290, 1
    %vm295 = vcmp.eq.s32.totalorder %v291, 1
    %vm296 = vcmp.eq.s32.totalorder %v292, 1
    %vm297 = vcmp.eq.s32.totalorder %v293, 1
    %v298 = vsel %vm294, %v284, 0.0
    %v299 = vsel %vm295, %v283, 0.0
    %v300 = vsel %vm296, %v282, 0.0
    %v301 = vsel %vm297, %v285, 0.0
    %v306 = vrot.slane %v136, 4
    %v307 = vrot.slane %v137, 4
    %v308 = vrot.slane %v138, 4
    %v309 = vrot.slane %v139, 4
    %v318 = vrot.slane %v190, 4
    %v319 = vrot.slane %v191, 4
    %v320 = vrot.slane %v192, 4
    %v321 = vrot.slane %v193, 4
    %v330 = vrot.slane %v215, 4
    %v331 = vrot.slane %v216, 4
    %v332 = vrot.slane %v217, 4
    %v333 = vrot.slane %v218, 4
    %v342 = vrot.slane %v269, 4
    %v343 = vrot.slane %v270, 4
    %v344 = vrot.slane %v271, 4
    %v345 = vrot.slane %v272, 4
    %vm350 = vcmask 1043456
    %v351 = vsel %vm350, %v111, %v306
    %v352 = vsel %vm350, %v112, %v307
    %v353 = vsel %vm350, %v113, %v308
    %v354 = vsel %vm350, %v114, %v309
    %v355 = vsel %vm350, %v165, %v318
    %v356 = vsel %vm350, %v166, %v319
    %v357 = vsel %vm350, %v167, %v320
    %v358 = vsel %vm350, %v168, %v321
    %v359 = vsel %vm350, %v47, %v330
    %v360 = vsel %vm350, %v48, %v331
    %v361 = vsel %vm350, %v53, %v332
    %v362 = vsel %vm350, %v54, %v333
    %v363 = vsel %vm350, %v244, %v342
    %v364 = vsel %vm350, %v245, %v343
    %v365 = vsel %vm350, %v246, %v344
    %v366 = vsel %vm350, %v247, %v345
    %v367 = vsel %vm350, %v298, 1.0
    %v368 = vsel %vm350, %v299, 1.0
    %v369 = vsel %vm350, %v300, 1.0
    %v370 = vsel %vm350, %v301, 1.0
    %v371 = vld [vmem:[#allocation5] sm:$0xff]
    %vm372 = vcmask 302080
    %v374 = vsel %vm372, %v371, 0
    %vm376 = vcmask 1044480
    %v378 = vsel %vm376, %v367, 0
    %v381 = vsel %vm376, %v368, 0
    %v384 = vsel %vm376, %v369, 0
    %v387 = vsel %vm376, %v370, 0
    %389 = vmatpush.msra.mxu0 0.0
    %390 = vmatpush.msra.mxu0 0.0
    %391 = vmatpush.msra.mxu0 0.0
    %392 = vmatpush.msra.mxu0 0.0
    %393 = vmatpush.msra.mxu0 0.0
    %394 = vmatpush.msra.mxu0 0.0
    %395 = vmatpush.msra.mxu0 0.0
    %396 = vmatpush.msra.mxu0 0.0
    %397 = vmatpush.msra.mxu0 0.0
    %398 = vmatpush.msra.mxu0 0.0
    %399 = vmatpush.msra.mxu0 0.0
    %400 = vmatpush.msra.mxu0 %v378
    %401 = vmatpush.msra.mxu0 %v363
    %402 = vmatpush.msra.mxu0 %v359
    %403 = vmatpush.msra.mxu0 %v355
    %404 = vmatpush.msra.mxu0 %v351
    %405 = vmatmul.f32.gmra.mxu0 %v374
    %v406 = vpop.f32.mrf.mxu0
    %v407 = vadd.f32 0.0, %v406
    %408 = vdwg.mxu0
    %409 = vmatpush.msra.mxu0 0.0
    %410 = vmatpush.msra.mxu0 0.0
    %411 = vmatpush.msra.mxu0 0.0
    %412 = vmatpush.msra.mxu0 0.0
    %413 = vmatpush.msra.mxu0 0.0
    %414 = vmatpush.msra.mxu0 0.0
    %415 = vmatpush.msra.mxu0 0.0
    %416 = vmatpush.msra.mxu0 0.0
    %417 = vmatpush.msra.mxu0 0.0
    %418 = vmatpush.msra.mxu0 0.0
    %419 = vmatpush.msra.mxu0 0.0
    %420 = vmatpush.msra.mxu0 %v381
    %421 = vmatpush.msra.mxu0 %v364
    %422 = vmatpush.msra.mxu0 %v360
    %423 = vmatpush.msra.mxu0 %v356
    %424 = vmatpush.msra.mxu0 %v352
    %425 = vmatmul.f32.gmra.mxu0 %v374
    %v426 = vpop.f32.mrf.mxu0
    %v427 = vadd.f32 0.0, %v426
    %428 = vdwg.mxu0
    %429 = vmatpush.msra.mxu0 0.0
    %430 = vmatpush.msra.mxu0 0.0
    %431 = vmatpush.msra.mxu0 0.0
    %432 = vmatpush.msra.mxu0 0.0
    %433 = vmatpush.msra.mxu0 0.0
    %434 = vmatpush.msra.mxu0 0.0
    %435 = vmatpush.msra.mxu0 0.0
    %436 = vmatpush.msra.mxu0 0.0
    %437 = vmatpush.msra.mxu0 0.0
    %438 = vmatpush.msra.mxu0 0.0
    %439 = vmatpush.msra.mxu0 0.0
    %440 = vmatpush.msra.mxu0 %v384
    %441 = vmatpush.msra.mxu0 %v365
    %442 = vmatpush.msra.mxu0 %v361
    %443 = vmatpush.msra.mxu0 %v357
    %444 = vmatpush.msra.mxu0 %v353
    %445 = vmatmul.f32.gmra.mxu0 %v374
    %v446 = vpop.f32.mrf.mxu0
    %v447 = vadd.f32 0.0, %v446
    %448 = vdwg.mxu0
    %449 = vmatpush.msra.mxu0 0.0
    %450 = vmatpush.msra.mxu0 0.0
    %451 = vmatpush.msra.mxu0 0.0
    %452 = vmatpush.msra.mxu0 0.0
    %453 = vmatpush.msra.mxu0 0.0
    %454 = vmatpush.msra.mxu0 0.0
    %455 = vmatpush.msra.mxu0 0.0
    %456 = vmatpush.msra.mxu0 0.0
    %457 = vmatpush.msra.mxu0 0.0
    %458 = vmatpush.msra.mxu0 0.0
    %459 = vmatpush.msra.mxu0 0.0
    %460 = vmatpush.msra.mxu0 %v387
    %461 = vmatpush.msra.mxu0 %v366
    %462 = vmatpush.msra.mxu0 %v362
    %463 = vmatpush.msra.mxu0 %v358
    %464 = vmatpush.msra.mxu0 %v354
    %465 = vmatmul.f32.gmra.mxu0 %v374
    %v466 = vpop.f32.mrf.mxu0
    %v467 = vadd.f32 0.0, %v466
    %468 = vdwg.mxu0
    %v469 = vmax.f32 %v407, 0.0
    %v470 = vmax.f32 %v427, 0.0
    %v471 = vmax.f32 %v447, 0.0
    %v472 = vmax.f32 %v467, 0.0
    %473 = vst [vmem:[#allocation7] sm:$0xff] %v469
    %474 = vst [vmem:[#allocation7 + $0x8] sm:$0xff] %v470
    %s475 = scalar_lea.vmem [#allocation7], 16
    %476 = vst [vmem:[%s475] sm:$0xff] %v471
    %477 = vst [vmem:[%s475 + $0x8] sm:$0xff] %v472
    // Predicated region
    $region18: #{tpu_custom_call.1} parent=1 // pred_check
      _
    $region19: #{tpu_custom_call.1} parent=1 // pred_check_branch
      %479 = sbr.rel (0) target = $region21
    $region20: #{tpu_custom_call.1} parent=1 // pred_region
      %481 = vsyncadd [#allocation4], 0
      %s482 = sshll.u32 [#allocation7], 4
      %s483 = int_to_ptr.vmem [resolvable:$true] %s482
      %s484 = sshll.u32 %s2, 4
      %s485 = int_to_ptr.hbm [resolvable:$true] %s484
      %490 = dma.vmem_to_hbm [thread:$0]  %s483, 512, %s485, [#allocation4], 256, 256, 16
    $region21: #{tpu_custom_call.1} parent=1 // pred_fallthru
      _
    // Predicated region
    $region22: #{tpu_custom_call.1} parent=1 // pred_check
      _
    $region23: #{tpu_custom_call.1} parent=1 // pred_check_branch
      %492 = sbr.rel (0) target = $region25
    $region24: #{tpu_custom_call.1} parent=1 // pred_region
      %494 = dma.done [#allocation4], 512
    $region25: #{tpu_custom_call.1} parent=1 // pred_fallthru
      _
    %495 = vsyncpa [#allocation3], 1
    %496 = vsyncpa [#allocation6], 1
    %497 = vsyncpa [#allocation4], 1

</llo_original>
